<compile_context>
chip_gen: v6e
topology: v6e:2x2x1
jax: 0.10.0
libtpu: 0.0.40
codegen_flags: <defaults>
</compile_context>

<pallas_src>
import functools

import jax
import jax.numpy as jnp
from jax.experimental import pallas as pl
from jax.experimental.pallas import tpu as pltpu

_BN_EPS = 1e-5                      # BatchNorm1d default
_TILE_CANDIDATES = (512, 256, 128)  # widest lane-dense output-column tile first


def _bn_relu(h, gamma, beta):
    """Training-mode BatchNorm1d (biased variance) + ReLU, all f32."""
    mean = jnp.mean(h, axis=0, keepdims=True)                      # (1, tO)
    var = jnp.mean(jnp.square(h - mean), axis=0, keepdims=True)    # biased variance
    inv = jax.lax.rsqrt(var + _BN_EPS)
    return jnp.maximum((h - mean) * inv * gamma + beta, 0.0)


def _decode_step(j, n_out_blocks, n_in_blocks):
    """Interleaved compute/copy schedule for grid step j.

    Steps alternate (compute 0, copy 0, compute 1, copy 1, ...) while both kinds remain,
    then the tail is whichever kind has blocks left.  Returns (is_compute, block_index)
    where block_index is the compute-block id if is_compute else the copy-block id.
    Used identically by the kernel body and all index_maps so they stay consistent.
    """
    m = min(n_out_blocks, n_in_blocks)
    tail_is_compute = n_out_blocks > n_in_blocks   # static Python bool
    in_pair = j < 2 * m
    is_compute = jnp.where(in_pair, (j % 2) == 0, tail_is_compute)
    blk = jnp.where(in_pair, j // 2, j - m)
    return is_compute, blk


def _fused_kernel_small(x_ref, w_ref, gamma_ref, beta_ref, out_ref, *, o_features):
    """Grid-less fallback: whole problem in one VMEM block, concat fused."""
    x = x_ref[...]
    h = jnp.dot(x.astype(jnp.bfloat16), w_ref[...],           # W arrives bf16
                preferred_element_type=jnp.float32)            # MXU, f32 accumulate
    y = _bn_relu(h, gamma_ref[...], beta_ref[...])
    out_ref[:, :o_features] = y.astype(out_ref.dtype)
    out_ref[:, o_features:] = x                                # fused torch.cat([out, x], 1)


def _fused_kernel_tiled(x_ref, w_ref, gamma_ref, beta_ref, out_ref, *,
                        n_out_blocks, n_in_blocks, tile):
    """One lane-dense output-column tile per grid step (interleaved compute/copy).

    compute step c : BN(ReLU(x @ W[:, c*tile:(c+1)*tile])) -> out[:, c*tile:(c+1)*tile]
    copy    step c : x[:, c*tile:(c+1)*tile] (sliced from the resident x block)
                     -> out[:, O + c*tile : O + (c+1)*tile]
    Every compute tile sees the full batch, so BN batch statistics are exact.
    """
    j = pl.program_id(0)
    is_compute, blk = _decode_step(j, n_out_blocks, n_in_blocks)

    @pl.when(is_compute)
    def _compute():
        # bf16 MXU operands, f32 accumulation. The x cast runs only n_out_blocks times
        # (1-2 for CTGAN sizes with 256/512-wide tiles) and is VALU filler here.
        xb = x_ref[...].astype(jnp.bfloat16)
        h = jnp.dot(xb, w_ref[...], preferred_element_type=jnp.float32)
        y = _bn_relu(h, gamma_ref[...], beta_ref[...])
        out_ref[...] = y.astype(out_ref.dtype)

    # Concat half: statically unrolled pl.when chain over copy blocks so every slice of
    # the resident x block is static (lane-aligned, no dynamic lane-dim indexing).
    not_compute = jnp.logical_not(is_compute)
    for c in range(n_in_blocks):
        @pl.when(jnp.logical_and(not_compute, blk == c))
        def _copy(c=c):
            out_ref[...] = x_ref[:, c * tile:(c + 1) * tile]


def _vmem_budget_bytes():
    """Per-core VMEM capacity minus headroom for compiler-internal scratch."""
    cap = None
    try:
        info = pltpu.get_tpu_info()
        cap = getattr(info, "vmem_capacity_bytes", None)
    except Exception:
        cap = None
    if not cap:
        cap = 64 << 20          # conservative fallback: v7x per-core VMEM
    return int(cap) - (12 << 20)


def residual_forward(x, w, b, gamma, beta):
    """x: (N, I); w: (I, O) (any float dtype, bf16 preferred); b, gamma, beta: (1, O).

    Returns (N, O + I) = cat([relu(batchnorm(x @ w)), x], dim=1).

    `b` (the Linear bias) is accepted for API parity but ignored: a per-feature constant
    added before training-mode BatchNorm is exactly cancelled by the mean subtraction.
    (Not valid for eval-mode BN with running statistics.)
    """
    del b
    N, I = x.shape
    O = w.shape[1]
    C = O + I
    gamma = gamma.reshape(1, O).astype(jnp.float32)
    beta = beta.reshape(1, O).astype(jnp.float32)
    # Stream weights as bf16 (stored bf16 by the caller in real use; cast is a no-op then).
    w_bf = w if w.dtype == jnp.bfloat16 else w.astype(jnp.bfloat16)
    out_shape = jax.ShapeDtypeStruct((N, C), x.dtype)

    tile = next((t for t in _TILE_CANDIDATES if O % t == 0 and I % t == 0), None)

    if tile is not None:
        # Lane-dense, pipelined, megacore-balanced path.
        nO, nI = O // tile, I // tile
        grid = (nO + nI,)

        def w_gb_map(j):
            # On copy steps, hold the block index at the most recent compute block so the
            # interleave never forces a redundant W / gamma / beta re-DMA.
            is_compute, blk = _decode_step(j, nO, nI)
            return (0, jnp.where(is_compute, blk, jnp.minimum(blk, nO - 1)))

        def out_map(j):
            is_compute, blk = _decode_step(j, nO, nI)
            return (0, jnp.where(is_compute, blk, nO + blk))

        itemsize = jnp.dtype(x.dtype).itemsize
        need = (
            2 * N * I * itemsize          # resident x (assume double-buffered worst case)
            + 2 * I * tile * 2            # bf16 W column tile, double-buffered
            + 2 * N * tile * itemsize     # output tile, double-buffered
            + 2 * 2 * tile * 4 * 2        # gamma / beta tiles, double-buffered
        )
        budget = _vmem_budget_bytes()
        vmem_limit = int(min(max(int(need * 1.25) + (4 << 20), 32 << 20), budget))

        cost = pl.CostEstimate(
            flops=2 * N * I * O,
            transcendentals=O,                       # one rsqrt per output feature
            bytes_accessed=int(
                N * I * itemsize                     # x read once (resident)
                + I * O * 2                          # bf16 W streamed once
                + 2 * O * 4                          # gamma + beta
                + N * C * itemsize                   # fused output write
            ),
        )

        kernel = functools.partial(_fused_kernel_tiled,
                                   n_out_blocks=nO, n_in_blocks=nI, tile=tile)
        return pl.pallas_call(
            kernel,
            out_shape=out_shape,
            grid=grid,
            in_specs=[
                pl.BlockSpec((N, I), lambda j: (0, 0)),   # x, resident (fetched once)
                pl.BlockSpec((I, tile), w_gb_map),        # bf16 W column tile
                pl.BlockSpec((1, tile), w_gb_map),        # gamma tile
                pl.BlockSpec((1, tile), w_gb_map),        # beta tile
            ],
            out_specs=pl.BlockSpec((N, tile), out_map),
            compiler_params=pltpu.CompilerParams(
                dimension_semantics=("parallel",),
                vmem_limit_bytes=vmem_limit,
            ),
            cost_estimate=cost,
        )(x, w_bf, gamma, beta)

    # Fallback: small / unaligned shapes — single fused block (concat still in-kernel).
    kernel = functools.partial(_fused_kernel_small, o_features=O)
    return pl.pallas_call(
        kernel,
        out_shape=out_shape,
        in_specs=[
            pl.BlockSpec((N, I), lambda: (0, 0)),
            pl.BlockSpec((I, O), lambda: (0, 0)),
            pl.BlockSpec((1, O), lambda: (0, 0)),
            pl.BlockSpec((1, O), lambda: (0, 0)),
        ],
        out_specs=pl.BlockSpec((N, C), lambda: (0, 0)),
    )(x, w_bf, gamma, beta)


def _reference(x, w_bf, b, gamma, beta):
    """Pure-JAX reference with full PyTorch training-mode semantics (bias included)."""
    h = jnp.dot(x.astype(jnp.bfloat16), w_bf, preferred_element_type=jnp.float32) + b
    mean = jnp.mean(h, axis=0, keepdims=True)
    var = jnp.mean(jnp.square(h - mean), axis=0, keepdims=True)
    h = (h - mean) * jax.lax.rsqrt(var + _BN_EPS) * gamma + beta
    h = jnp.maximum(h, 0.0)
    return jnp.concatenate([h.astype(x.dtype), x], axis=1)


if __name__ == "__main__":
    key = jax.random.PRNGKey(0)

    def _make_case(k, N, I, O):
        kx, kw, kb, kg, kbt = jax.random.split(k, 5)
        x = jax.random.normal(kx, (N, I), dtype=jnp.float32)
        bound = 1.0 / (I ** 0.5)
        w = jax.random.uniform(kw, (I, O), jnp.float32, -bound, bound)
        w_bf = w.astype(jnp.bfloat16)          # weights stored in bf16 (streamed as-is)
        b = jax.random.uniform(kb, (1, O), jnp.float32, -bound, bound)
        gamma = 1.0 + 0.1 * jax.random.normal(kg, (1, O), dtype=jnp.float32)
        beta = 0.1 * jax.random.normal(kbt, (1, O), dtype=jnp.float32)
        return x, w_bf, b, gamma, beta

    keys = jax.random.split(key, 4)
    cases = (
        (8, 32, 64),      # unaligned -> single-block fused fallback
        (16, 128, 256),   # tile=128, interleave with compute tail
        (32, 512, 256),   # tile=256, interleave with copy tail
        (16, 512, 512),   # tile=512, one compute + one copy step
    )
    for (N, I, O), k in zip(cases, keys):
        x, w_bf, b, gamma, beta = _make_case(k, N, I, O)
        out = jax.block_until_ready(residual_forward(x, w_bf, b, gamma, beta))
        assert out.shape == (N, O + I), out.shape
        ref = _reference(x, w_bf, b, gamma, beta)
        assert jnp.allclose(out, ref, atol=1e-3, rtol=1e-3), f"mismatch at {(N, I, O)}"

    print("KERNEL_OK")
</pallas_src>

<mosaic_0001>
module attributes {stable_mosaic.version = 11 : i64} {
  func.func @_fused_kernel_small(%arg0: memref<8x32xf32, #tpu.memory_space<vmem>>, %arg1: memref<32x64xbf16, #tpu.memory_space<vmem>>, %arg2: memref<1x64xf32, #tpu.memory_space<vmem>>, %arg3: memref<1x64xf32, #tpu.memory_space<vmem>>, %arg4: memref<8x96xf32, #tpu.memory_space<vmem>>) attributes {dimension_semantics = [], scalar_prefetch = 0 : i64, scratch_operands = 0 : i64, tpu.core_type = #tpu.core_type<tc>} {
    %c0 = arith.constant 0 : index
    %c0_0 = arith.constant 0 : index
    %0 = vector.load %arg0[%c0, %c0_0] : memref<8x32xf32, #tpu.memory_space<vmem>>, vector<8x32xf32>
    %1 = arith.truncf %0 : vector<8x32xf32> to vector<8x32xbf16>
    %c0_1 = arith.constant 0 : index
    %c0_2 = arith.constant 0 : index
    %2 = vector.load %arg1[%c0_1, %c0_2] : memref<32x64xbf16, #tpu.memory_space<vmem>>, vector<32x64xbf16>
    %cst = arith.constant dense<0.000000e+00> : vector<8x64xf32>
    %3 = tpu.matmul %1, %2, %cst {dimension_numbers = #tpu.dot_dimension_numbers<[1], [0], [0], [1], [0, 0, 1, 1], [], []>} : vector<8x32xbf16>, vector<32x64xbf16>, vector<8x64xf32> -> vector<8x64xf32>
    %c0_3 = arith.constant 0 : index
    %c0_4 = arith.constant 0 : index
    %4 = vector.load %arg2[%c0_3, %c0_4] : memref<1x64xf32, #tpu.memory_space<vmem>>, vector<1x64xf32>
    %c0_5 = arith.constant 0 : index
    %c0_6 = arith.constant 0 : index
    %5 = vector.load %arg3[%c0_5, %c0_6] : memref<1x64xf32, #tpu.memory_space<vmem>>, vector<1x64xf32>
    %cst_7 = arith.constant dense<0.000000e+00> : vector<64xf32>
    %6 = vector.multi_reduction <add>, %3, %cst_7 [0] : vector<8x64xf32> to vector<64xf32>
    %7 = vector.shape_cast %6 : vector<64xf32> to vector<1x64xf32>
    %cst_8 = arith.constant 8.000000e+00 : f32
    %8 = vector.broadcast %cst_8 : f32 to vector<1x64xf32>
    %9 = arith.divf %7, %8 : vector<1x64xf32>
    %10 = vector.broadcast %9 : vector<1x64xf32> to vector<8x64xf32>
    %11 = arith.subf %3, %10 : vector<8x64xf32>
    %12 = arith.mulf %11, %11 : vector<8x64xf32>
    %cst_9 = arith.constant dense<0.000000e+00> : vector<64xf32>
    %13 = vector.multi_reduction <add>, %12, %cst_9 [0] : vector<8x64xf32> to vector<64xf32>
    %14 = vector.shape_cast %13 : vector<64xf32> to vector<1x64xf32>
    %cst_10 = arith.constant 8.000000e+00 : f32
    %15 = vector.broadcast %cst_10 : f32 to vector<1x64xf32>
    %16 = arith.divf %14, %15 : vector<1x64xf32>
    %cst_11 = arith.constant 9.99999974E-6 : f32
    %17 = vector.broadcast %cst_11 : f32 to vector<1x64xf32>
    %18 = arith.addf %16, %17 : vector<1x64xf32>
    %19 = math.rsqrt %18 : vector<1x64xf32>
    %20 = vector.broadcast %9 : vector<1x64xf32> to vector<8x64xf32>
    %21 = arith.subf %3, %20 : vector<8x64xf32>
    %22 = vector.broadcast %19 : vector<1x64xf32> to vector<8x64xf32>
    %23 = arith.mulf %21, %22 : vector<8x64xf32>
    %24 = vector.broadcast %4 : vector<1x64xf32> to vector<8x64xf32>
    %25 = arith.mulf %23, %24 : vector<8x64xf32>
    %26 = vector.broadcast %5 : vector<1x64xf32> to vector<8x64xf32>
    %27 = arith.addf %25, %26 : vector<8x64xf32>
    %cst_12 = arith.constant 0.000000e+00 : f32
    %28 = vector.broadcast %cst_12 : f32 to vector<8x64xf32>
    %29 = arith.maximumf %27, %28 : vector<8x64xf32>
    %c0_13 = arith.constant 0 : index
    %c0_14 = arith.constant 0 : index
    %30 = vector.load %arg4[%c0_13, %c0_14] : memref<8x96xf32, #tpu.memory_space<vmem>>, vector<8x64xf32>
    tpu.vector_store %arg4[%c0_13, %c0_14], %29 {strides = array<i32>} : memref<8x96xf32, #tpu.memory_space<vmem>>, vector<8x64xf32>,
    %c0_15 = arith.constant 0 : index
    %c64 = arith.constant 64 : index
    %31 = vector.load %arg4[%c0_15, %c64] : memref<8x96xf32, #tpu.memory_space<vmem>>, vector<8x32xf32>
    tpu.vector_store %arg4[%c0_15, %c64], %0 {strides = array<i32>} : memref<8x96xf32, #tpu.memory_space<vmem>>, vector<8x32xf32>,
    return
  }
}

</mosaic_0001>

<llo_original>
// kernel: tpu_custom_call.1
$region0: #{tpu_custom_call.1}
  #allocation0 [shape = 'u32[]', space=smem, size = 0x4, offset = 0x4, fixed_abs, tag = 'smem constant byte address 0x4 - core index']
  #allocation1 [shape = 'u32[144,128]{1,0:T(1,128)}', space=vmem, size = 0x12000, scoped, tag = 'internal scratch']
  %s0 = inlined_call_operand.hbm [shape: f32[8,32], index: 0, kind: input, shape index: {}]
  %s1 = inlined_call_operand.hbm [shape: bf16[32,64], index: 1, kind: input, shape index: {}]
  %s2 = inlined_call_operand.vmem [shape: f32[1,64], index: 2, kind: input, shape index: {}]
  %s3 = inlined_call_operand.vmem [shape: f32[1,64], index: 3, kind: input, shape index: {}]
  %s4 = inlined_call_operand.hbm [shape: f32[8,96], index: 4, kind: output, shape index: {}]
  %s5 = sld [smem:[#allocation0]]
  $region34: #{tpu_custom_call.1} parent=0
    _
  %s7 = ssub.s32 1, %s5
  %s8 = scalar_select 0, %s7, %s5
  $region1: #{tpu_custom_call.1} parent=0
    #allocation2 [shape = 'u8[4096]{0}', space=vmem, size = 0x1000, scoped, tag = 'input window, operand 0, single buffered']
    #allocation3 [shape = 's32[1]{0}', space=sflag, size = 0x4, scoped, tag = 'scoped memory for tpu_custom_call.1']
    #allocation4 [shape = 's32[1]{0}', space=sflag, size = 0x4, scoped, tag = 'scoped memory for tpu_custom_call.1']
    #allocation5 [shape = 'u8[8192]{0}', space=vmem, size = 0x2000, scoped, tag = 'input window, operand 1, single buffered']
    #allocation6 [shape = 's32[1]{0}', space=sflag, size = 0x4, scoped, tag = 'scoped memory for tpu_custom_call.1']
    #allocation7 [shape = 'u8[4096]{0}', space=vmem, size = 0x1000, scoped, tag = 'output window, operand 0, single buffered']
    %9 = vsyncpa [#allocation3], 0
    %10 = vsyncpa [#allocation6], 0
    %11 = vsyncpa [#allocation4], 0
    // Predicated region
    $region2: #{tpu_custom_call.1} parent=1 // pred_check
      _
    $region3: #{tpu_custom_call.1} parent=1 // pred_check_branch
      %13 = sbr.rel (0) target = $region5
    $region4: #{tpu_custom_call.1} parent=1 // pred_region
      %s15 = ssub.s32 128, 128
      %16 = vsyncadd [#allocation3], %s15
      %s18 = sshll.u32 [#allocation2], 4
      %s19 = int_to_ptr.vmem [resolvable:$true] %s18
      %21 = dma.hbm_to_vmem [thread:$0]  %s0, 128, %s19, [#allocation3]
    $region5: #{tpu_custom_call.1} parent=1 // pred_fallthru
      _
    // Predicated region
    $region6: #{tpu_custom_call.1} parent=1 // pred_check
      _
    $region7: #{tpu_custom_call.1} parent=1 // pred_check_branch
      %23 = sbr.rel (0) target = $region9
    $region8: #{tpu_custom_call.1} parent=1 // pred_region
      %s25 = ssub.s32 256, 256
      %26 = vsyncadd [#allocation6], %s25
      %s27 = sshll.u32 [#allocation5], 4
      %s28 = int_to_ptr.vmem [resolvable:$true] %s27
      %33 = dma.hbm_to_vmem [thread:$0]  %s1, 256, %s28, [#allocation6], 64, 64, 4
    $region9: #{tpu_custom_call.1} parent=1 // pred_fallthru
      _
    // Predicated region
    $region10: #{tpu_custom_call.1} parent=1 // pred_check
      _
    $region11: #{tpu_custom_call.1} parent=1 // pred_check_branch
      %35 = sbr.rel (0) target = $region13
    $region12: #{tpu_custom_call.1} parent=1 // pred_region
      _
    $region13: #{tpu_custom_call.1} parent=1 // pred_fallthru
      _
    // Predicated region
    $region14: #{tpu_custom_call.1} parent=1 // pred_check
      _
    $region15: #{tpu_custom_call.1} parent=1 // pred_check_branch
      %37 = sbr.rel (0) target = $region17
    $region16: #{tpu_custom_call.1} parent=1 // pred_region
      _
    $region17: #{tpu_custom_call.1} parent=1 // pred_fallthru
      _
    // Predicated region
    $region18: #{tpu_custom_call.1} parent=1 // pred_check
      _
    $region19: #{tpu_custom_call.1} parent=1 // pred_check_branch
      %39 = sbr.rel (0) target = $region21
    $region20: #{tpu_custom_call.1} parent=1 // pred_region
      %40 = dma.done [#allocation3], 128
    $region21: #{tpu_custom_call.1} parent=1 // pred_fallthru
      _
    // Predicated region
    $region22: #{tpu_custom_call.1} parent=1 // pred_check
      _
    $region23: #{tpu_custom_call.1} parent=1 // pred_check_branch
      %42 = sbr.rel (0) target = $region25
    $region24: #{tpu_custom_call.1} parent=1 // pred_region
      %43 = dma.done [#allocation6], 256
    $region25: #{tpu_custom_call.1} parent=1 // pred_fallthru
      _
    %v45 = vld [vmem:[#allocation2] sm:$0xff]
    %v46 = vpack.c.bf16 %v45, %v45
    %v47 = vld [vmem:[#allocation5] sm:$0xf]
    %v48 = vld [vmem:[#allocation5 + $0x4] sm:$0xf]
    %v49 = vld [vmem:[#allocation5 + $0x8] sm:$0xf]
    %v50 = vld [vmem:[#allocation5 + $0xc] sm:$0xf]
    %v55 = vunpack.c.l.b16 %v47
    %v56 = vunpack.c.l.b16 %v48
    %v57 = vunpack.c.l.b16 %v49
    %v58 = vunpack.c.l.b16 %v50
    %v59 = vpack.c.b16 %v56, %v55
    %v60 = vpack.c.b16 %v58, %v57
    %vm63 = vcmask 261120
    %v65 = vsel %vm63, %v46, 0
    %67 = vmatprep.subr.bf16.mxu0 0
    %68 = vmatpush1.bf16.msra.mxu0 0
    %69 = vmatprep.subr.bf16.mxu0 0
    %70 = vmatpush1.bf16.msra.mxu0 0
    %71 = vmatprep.subr.bf16.mxu0 0
    %72 = vmatpush1.bf16.msra.mxu0 0
    %73 = vmatprep.subr.bf16.mxu0 0
    %74 = vmatpush1.bf16.msra.mxu0 0
    %75 = vmatprep.subr.bf16.mxu0 0
    %76 = vmatpush1.bf16.msra.mxu0 0
    %77 = vmatprep.subr.bf16.mxu0 0
    %78 = vmatpush1.bf16.msra.mxu0 0
    %79 = vmatprep.subr.bf16.mxu0 0
    %80 = vmatpush1.bf16.msra.mxu0 %v60
    %81 = vmatprep.subr.bf16.mxu0 0
    %82 = vmatpush1.bf16.msra.mxu0 %v59
    %83 = vmatprep.subr.bf16.mxu0 0
    %84 = vmatpush2.bf16.msra.mxu0 0
    %85 = vmatprep.subr.bf16.mxu0 0
    %86 = vmatpush2.bf16.msra.mxu0 0
    %87 = vmatprep.subr.bf16.mxu0 0
    %88 = vmatpush2.bf16.msra.mxu0 0
    %89 = vmatprep.subr.bf16.mxu0 0
    %90 = vmatpush2.bf16.msra.mxu0 0
    %91 = vmatprep.subr.bf16.mxu0 0
    %92 = vmatpush2.bf16.msra.mxu0 0
    %93 = vmatprep.subr.bf16.mxu0 0
    %94 = vmatpush2.bf16.msra.mxu0 0
    %95 = vmatprep.subr.bf16.mxu0 0
    %96 = vmatpush2.bf16.msra.mxu0 0
    %97 = vmatprep.subr.bf16.mxu0 0
    %98 = vmatpush2.bf16.msra.mxu0 0
    %99 = vmatprep.mubr.bf16.mxu0 0
    %100 = vmatmul.mubr.bf16.gmra.mxu0 %v65
    %v101 = vpop.f32.mrf.mxu0
    %v102 = vadd.f32 0.0, %v101
    %v103 = vpop.f32.mrf.mxu0
    %v104 = vpop.f32.mrf.mxu0
    %v105 = vpop.f32.mrf.mxu0
    %106 = vdwg.mxu0
    %v107 = vld [vmem:[%s2] sm:$0x1]
    %v108 = vld [vmem:[%s3] sm:$0x1]
    %vm109 = vcmask 523264
    %v110 = vsel %vm109, %v102, 0.0
    %v111 = vrot.slane %v110, 4
    %v112 = vadd.f32 %v110, %v111
    %v113 = vrot.slane %v112, 2
    %v114 = vadd.f32 %v112, %v113
    %v115 = vrot.slane %v114, 1
    %v116 = vadd.f32 %v114, %v115
    %v117 = vrcp.pop 8.0
    %v118 = vmul.f32 %v116, %v117
    %v119 = vsub.f32 %v102, %v118
    %v120 = vmul.f32 %v119, %v119
    %v121 = vsel %vm109, %v120, 0.0
    %v122 = vrot.slane %v121, 4
    %v123 = vadd.f32 %v121, %v122
    %v124 = vrot.slane %v123, 2
    %v125 = vadd.f32 %v123, %v124
    %v126 = vrot.slane %v125, 1
    %v127 = vadd.f32 %v125, %v126
    %v128 = vmul.f32 %v127, %v117
    %v129 = vadd.f32 %v128, 1e-05
    %v130 = vrsqrt.pop %v129
    %v131 = vmul.f32 %v119, %v130
    %v133 = vlaneseq
    %v134 = vshrl.u32 %v133, 7
    %v135 = vsub.s32 0, %v134
    %v136 = vrot.slane %v107, %v135
    %v138 = vmul.f32 %v131, %v136
    %v140 = vlaneseq
    %v141 = vshrl.u32 %v140, 7
    %v142 = vsub.s32 0, %v141
    %v143 = vrot.slane %v108, %v142
    %v145 = vadd.f32 %v138, %v143
    %v146 = vmax.f32 %v145, 0.0
    %147 = vst.msk [vmem:[#allocation7] sm:$0xff] %vm109, %v146
    %149 = vrot.lane.b32.xlu0 %v45, 64
    %v150 = vpop.permute.xlu0 %149
    %vm152 = vcmask 785920
    %153 = vst.msk [vmem:[#allocation7] sm:$0xff] %vm152, %v150
    // Predicated region
    $region26: #{tpu_custom_call.1} parent=1 // pred_check
      _
    $region27: #{tpu_custom_call.1} parent=1 // pred_check_branch
      %155 = sbr.rel (0) target = $region29
    $region28: #{tpu_custom_call.1} parent=1 // pred_region
      %s157 = ssub.s32 128, 128
      %158 = vsyncadd [#allocation4], %s157
      %s160 = sshll.u32 [#allocation7], 4
      %s161 = int_to_ptr.vmem [resolvable:$true] %s160
      %163 = dma.vmem_to_hbm [thread:$0]  %s161, 128, %s4, [#allocation4]
    $region29: #{tpu_custom_call.1} parent=1 // pred_fallthru
      _
    // Predicated region
    $region30: #{tpu_custom_call.1} parent=1 // pred_check
      _
    $region31: #{tpu_custom_call.1} parent=1 // pred_check_branch
      %165 = sbr.rel (0) target = $region33
    $region32: #{tpu_custom_call.1} parent=1 // pred_region
      %166 = dma.done [#allocation4], 128
    $region33: #{tpu_custom_call.1} parent=1 // pred_fallthru
      _
    %167 = vsyncpa [#allocation3], 1
    %168 = vsyncpa [#allocation6], 1
    %169 = vsyncpa [#allocation4], 1

</llo_original>
